<compile_context>
chip_gen: v7x
topology: tpu7x:2x2x1
jax: 0.10.0
libtpu: 0.0.40
codegen_flags: <defaults>
</compile_context>

<pallas_src>
import math
import functools

import jax
import jax.numpy as jnp
from jax.experimental import pallas as pl
from jax.experimental.pallas import tpu as pltpu


# ----------------------------------------------------------------------------
# Tiled matmul kernel (used for the fused QKV projection and the O projection)
# ----------------------------------------------------------------------------
def _matmul_kernel(x_ref, w_ref, o_ref, acc_ref):
    @pl.when(pl.program_id(2) == 0)
    def _init():
        acc_ref[...] = jnp.zeros_like(acc_ref)

    acc_ref[...] += jnp.dot(x_ref[...], w_ref[...],
                            preferred_element_type=jnp.float32)

    @pl.when(pl.program_id(2) == pl.num_programs(2) - 1)
    def _finalize():
        o_ref[...] = acc_ref[...].astype(o_ref.dtype)


def _pick_tile(dim, targets=(256, 128)):
    # Prefer MXU-aligned tiles (256 for v6e/v7x, 128 for v5e); fall back to the
    # full dimension when it is small / not divisible (blocks equal to the full
    # array dims are always legal).
    for t in targets:
        if dim % t == 0:
            return t
    return dim


def pallas_matmul(x, w):
    """x: (M, K), w: (K, N) -> (M, N)."""
    M, K = x.shape
    K2, N = w.shape
    assert K == K2
    tm = _pick_tile(M)
    tn = _pick_tile(N)
    tk = _pick_tile(K)
    grid = (M // tm, N // tn, K // tk)
    # TODO(synk): at model sizes raise vmem_limit_bytes (v6e has 128 MiB
    # physical) and cast operands to bf16 for the MXU fast path.
    return pl.pallas_call(
        _matmul_kernel,
        out_shape=jax.ShapeDtypeStruct((M, N), x.dtype),
        grid_spec=pltpu.PrefetchScalarGridSpec(
            num_scalar_prefetch=0,
            grid=grid,
            in_specs=[pl.BlockSpec((tm, tk), lambda i, j, k: (i, k)),
                      pl.BlockSpec((tk, tn), lambda i, j, k: (k, j))],
            out_specs=pl.BlockSpec((tm, tn), lambda i, j, k: (i, j)),
            scratch_shapes=[pltpu.VMEM((tm, tn), jnp.float32)]),
        compiler_params=pltpu.CompilerParams(
            dimension_semantics=("parallel", "parallel", "arbitrary")),
    )(x, w)


# ----------------------------------------------------------------------------
# Fused attention kernel: rotary + GQA + causal mask + softmax + PV
# ----------------------------------------------------------------------------
def _fused_attn_kernel(scale, n_heads, n_kv_heads, head_dim, causal,
                       qkv_ref, cos_ref, sin_ref, o_ref):
    hd = head_dim
    half = hd // 2
    n_rep = n_heads // n_kv_heads
    q_dim = n_heads * hd
    kv_dim = n_kv_heads * hd

    qkv = qkv_ref[0]                       # (S, q_dim + 2*kv_dim)
    S = qkv.shape[0]
    cos = cos_ref[...]                     # (S, hd // 2)
    sin = sin_ref[...]                     # (S, hd // 2)

    q_all = qkv[:, :q_dim]
    k_all = qkv[:, q_dim:q_dim + kv_dim]
    v_all = qkv[:, q_dim + kv_dim:]

    if causal:
        row = jax.lax.broadcasted_iota(jnp.int32, (S, S), 0)
        col = jax.lax.broadcasted_iota(jnp.int32, (S, S), 1)
        mask_add = jnp.where(row >= col, 0.0, -1e9).astype(jnp.float32)

    def rope(xh):
        # xh columns are laid out [re_half | im_half] per head (weight rows
        # were permuted at init), so RoPE is pure elementwise VPU math on
        # contiguous static slices -- no in-kernel lane shuffles needed.
        xr, xi = xh[:, :half], xh[:, half:]
        return jnp.concatenate([xr * cos - xi * sin,
                                xr * sin + xi * cos], axis=-1)

    # Rotate each shared KV head once (GQA: query heads index their group's
    # KV head directly; nothing is repeated / materialized).
    k_rot = []
    v_heads = []
    for g in range(n_kv_heads):
        k_rot.append(rope(k_all[:, g * hd:(g + 1) * hd]))
        v_heads.append(v_all[:, g * hd:(g + 1) * hd])

    # All heads of this batch element are processed in one grid step; the
    # per-head loop is static (tiny H here).
    # TODO(synk): for large H / large S switch to head-blocked batched einsum
    #             with flash-style KV streaming (needed for v7x's 64 MiB VMEM).
    outs = []
    for h in range(n_heads):
        g = h // n_rep
        q_rot = rope(q_all[:, h * hd:(h + 1) * hd])
        s = jax.lax.dot_general(q_rot, k_rot[g], (((1,), (1,)), ((), ())),
                                preferred_element_type=jnp.float32) * scale
        if causal:
            s = s + mask_add
        s = s - jnp.max(s, axis=-1, keepdims=True)
        p = jnp.exp(s)
        # exact reciprocal to keep the f32 check tight; at scale use
        # pl.reciprocal(l, approx=True) to move the divide onto the EUP.
        p = p * (1.0 / jnp.sum(p, axis=-1, keepdims=True))
        outs.append(jnp.dot(p, v_heads[g], preferred_element_type=jnp.float32))

    # Single lane-dense store: (S, n_heads * head_dim).
    o_ref[0] = jnp.concatenate(outs, axis=-1)


def pallas_fused_attention(qkv, cos, sin, *, n_heads, n_kv_heads, head_dim,
                           scale, causal=True):
    """qkv: (B, S, (H + 2*Hkv) * hd) -> (B, S, H * hd)."""
    B, S, QKV = qkv.shape
    out_d = n_heads * head_dim
    kernel = functools.partial(_fused_attn_kernel, scale, n_heads,
                               n_kv_heads, head_dim, causal)
    return pl.pallas_call(
        kernel,
        out_shape=jax.ShapeDtypeStruct((B, S, out_d), jnp.float32),
        grid=(B,),
        in_specs=[
            pl.BlockSpec((1, S, QKV), lambda b: (b, 0, 0)),
            pl.BlockSpec((S, head_dim // 2), lambda b: (0, 0)),
            pl.BlockSpec((S, head_dim // 2), lambda b: (0, 0)),
        ],
        out_specs=pl.BlockSpec((1, S, out_d), lambda b: (b, 0, 0)),
        compiler_params=pltpu.CompilerParams(
            dimension_semantics=("parallel",)),
    )(qkv, cos, sin)


# ----------------------------------------------------------------------------
# Init-time weight layout + rotary tables
# ----------------------------------------------------------------------------
def precompute_freqs_cis(head_dim, seqlen, theta=10000.0):
    freqs = 1.0 / (theta ** (jnp.arange(0, head_dim, 2, dtype=jnp.float32)
                             / head_dim))
    t = jnp.arange(seqlen, dtype=jnp.float32)
    angles = jnp.outer(t, freqs)          # (S, head_dim // 2)
    return jnp.cos(angles), jnp.sin(angles)


def _rotary_split_perm(n_heads, head_dim):
    # Per head: [0,2,...,hd-2, 1,3,...,hd-1] -> interleaved pairs become
    # contiguous [re_half | im_half] halves after the projection.
    per_head = jnp.concatenate([jnp.arange(0, head_dim, 2),
                                jnp.arange(1, head_dim, 2)])
    return (jnp.arange(n_heads)[:, None] * head_dim
            + per_head[None, :]).reshape(-1)


def prepare_weights(wq, wk, wv, wo, n_heads, n_kv_heads, head_dim):
    """One-time: permute wq/wk rows for split-RoPE layout, fuse QKV, transpose."""
    wq_p = wq[_rotary_split_perm(n_heads, head_dim)]
    wk_p = wk[_rotary_split_perm(n_kv_heads, head_dim)]
    wqkv_t = jnp.concatenate([wq_p, wk_p, wv], axis=0).T   # (D, (H+2Hkv)*hd)
    wo_t = wo.T                                            # (H*hd, D)
    return wqkv_t, wo_t


# ----------------------------------------------------------------------------
# Forward pass
# ----------------------------------------------------------------------------
def attention_forward(x, wqkv_t, wo_t, cos, sin, n_heads, n_kv_heads,
                      head_dim):
    B, S, D = x.shape
    scale = 1.0 / math.sqrt(head_dim)

    x2 = x.reshape(B * S, D)
    qkv = pallas_matmul(x2, wqkv_t).reshape(B, S, -1)       # fused QKV GEMM

    attn = pallas_fused_attention(
        qkv, cos, sin, n_heads=n_heads, n_kv_heads=n_kv_heads,
        head_dim=head_dim, scale=scale, causal=True)        # (B, S, H*hd)

    out = pallas_matmul(attn.reshape(B * S, n_heads * head_dim),
                        wo_t).reshape(B, S, D)
    return out


# ----------------------------------------------------------------------------
# Pure-JAX reference (original weight layout, interleaved rotary)
# ----------------------------------------------------------------------------
def _apply_rotary_interleaved(x, cos, sin):
    B, S, H, Hd = x.shape
    xr = x.reshape(B, S, H, Hd // 2, 2)
    x_re, x_im = xr[..., 0], xr[..., 1]
    c = cos[None, :, None, :]
    s = sin[None, :, None, :]
    o_re = x_re * c - x_im * s
    o_im = x_re * s + x_im * c
    return jnp.stack([o_re, o_im], axis=-1).reshape(B, S, H, Hd)


def attention_reference(x, wq, wk, wv, wo, cos, sin, n_heads, n_kv_heads):
    B, S, D = x.shape
    head_dim = D // n_heads
    n_rep = n_heads // n_kv_heads
    xq = (x @ wq.T).reshape(B, S, n_heads, head_dim)
    xk = (x @ wk.T).reshape(B, S, n_kv_heads, head_dim)
    xv = (x @ wv.T).reshape(B, S, n_kv_heads, head_dim)
    xq = _apply_rotary_interleaved(xq, cos, sin)
    xk = _apply_rotary_interleaved(xk, cos, sin)
    keys = jnp.repeat(xk, n_rep, axis=2)
    values = jnp.repeat(xv, n_rep, axis=2)
    q = jnp.transpose(xq, (0, 2, 1, 3))
    k = jnp.transpose(keys, (0, 2, 1, 3))
    v = jnp.transpose(values, (0, 2, 1, 3))
    causal = jnp.tril(jnp.ones((S, S), dtype=jnp.float32))
    mask = jnp.where(causal == 1.0, 0.0, -1e9)[None, None, :, :]
    scores = jnp.einsum('bhqd,bhkd->bhqk', q, k) / math.sqrt(head_dim) + mask
    p = jax.nn.softmax(scores, axis=-1)
    out = jnp.einsum('bhqk,bhkd->bhqd', p, v)
    out = jnp.transpose(out, (0, 2, 1, 3)).reshape(B, S, n_heads * head_dim)
    return out @ wo.T


# ----------------------------------------------------------------------------
# Main
# ----------------------------------------------------------------------------
if __name__ == "__main__":
    B, S, D = 2, 8, 32
    n_heads, n_kv_heads = 4, 2
    head_dim = D // n_heads

    key = jax.random.PRNGKey(0)
    kx, kq, kk, kv, ko = jax.random.split(key, 5)
    x = jax.random.normal(kx, (B, S, D), dtype=jnp.float32)
    wq = 0.02 * jax.random.normal(kq, (n_heads * head_dim, D), jnp.float32)
    wk = 0.02 * jax.random.normal(kk, (n_kv_heads * head_dim, D), jnp.float32)
    wv = 0.02 * jax.random.normal(kv, (n_kv_heads * head_dim, D), jnp.float32)
    wo = 0.02 * jax.random.normal(ko, (D, n_heads * head_dim), jnp.float32)

    cos, sin = precompute_freqs_cis(head_dim, S)
    wqkv_t, wo_t = prepare_weights(wq, wk, wv, wo, n_heads, n_kv_heads,
                                   head_dim)

    out = attention_forward(x, wqkv_t, wo_t, cos, sin, n_heads, n_kv_heads,
                            head_dim)
    out = jax.block_until_ready(out)

    ref = attention_reference(x, wq, wk, wv, wo, cos, sin,
                              n_heads, n_kv_heads)
    assert out.shape == (B, S, D)
    assert jnp.allclose(out, ref, atol=2e-4, rtol=2e-4), (
        float(jnp.max(jnp.abs(out - ref))))

    print("KERNEL_OK")
</pallas_src>

<mosaic_0001>
module attributes {stable_mosaic.version = 11 : i64} {
  func.func @_matmul_kernel(%arg0: i32, %arg1: i32, %arg2: i32, %arg3: memref<16x32xf32, #tpu.memory_space<vmem>>, %arg4: memref<32x64xf32, #tpu.memory_space<vmem>>, %arg5: memref<16x64xf32, #tpu.memory_space<vmem>>, %arg6: memref<16x64xf32, #tpu.memory_space<vmem>>) attributes {dimension_semantics = [#tpu.dimension_semantics<parallel>, #tpu.dimension_semantics<parallel>, #tpu.dimension_semantics<arbitrary>], iteration_bounds = array<i64: 1, 1, 1>, scalar_prefetch = 0 : i64, scratch_operands = 1 : i64, tpu.core_type = #tpu.core_type<tc>, window_params = [{transform_indices = @transform_0, window_bounds = array<i64: 16, 32>}, {transform_indices = @transform_1, window_bounds = array<i64: 32, 64>}, {transform_indices = @transform_2, window_bounds = array<i64: 16, 64>}]} {
    %c0_i32 = arith.constant 0 : i32
    %0 = arith.cmpi eq, %arg2, %c0_i32 : i32
    %1 = arith.extui %0 : i1 to i32
    %c0_i32_0 = arith.constant 0 : i32
    %2 = arith.cmpi ne, %1, %c0_i32_0 : i32
    scf.if %2 {
      %cst_10 = arith.constant 0.000000e+00 : f32
      %12 = vector.broadcast %cst_10 : f32 to vector<16x64xf32>
      %c0_11 = arith.constant 0 : index
      %c0_12 = arith.constant 0 : index
      %13 = vector.load %arg6[%c0_11, %c0_12] : memref<16x64xf32, #tpu.memory_space<vmem>>, vector<16x64xf32>
      tpu.vector_store %arg6[%c0_11, %c0_12], %12 {strides = array<i32>} : memref<16x64xf32, #tpu.memory_space<vmem>>, vector<16x64xf32>,
    } else {
    }
    %c0 = arith.constant 0 : index
    %c0_1 = arith.constant 0 : index
    %3 = vector.load %arg6[%c0, %c0_1] : memref<16x64xf32, #tpu.memory_space<vmem>>, vector<16x64xf32>
    %c0_2 = arith.constant 0 : index
    %c0_3 = arith.constant 0 : index
    %4 = vector.load %arg3[%c0_2, %c0_3] : memref<16x32xf32, #tpu.memory_space<vmem>>, vector<16x32xf32>
    %c0_4 = arith.constant 0 : index
    %c0_5 = arith.constant 0 : index
    %5 = vector.load %arg4[%c0_4, %c0_5] : memref<32x64xf32, #tpu.memory_space<vmem>>, vector<32x64xf32>
    %cst = arith.constant dense<0.000000e+00> : vector<16x64xf32>
    %6 = tpu.matmul %4, %5, %cst {dimension_numbers = #tpu.dot_dimension_numbers<[1], [0], [0], [1], [0, 0, 1, 1], [], []>} : vector<16x32xf32>, vector<32x64xf32>, vector<16x64xf32> -> vector<16x64xf32>
    %7 = arith.addf %3, %6 : vector<16x64xf32>
    %c0_6 = arith.constant 0 : index
    %c0_7 = arith.constant 0 : index
    %8 = vector.load %arg6[%c0_6, %c0_7] : memref<16x64xf32, #tpu.memory_space<vmem>>, vector<16x64xf32>
    tpu.vector_store %arg6[%c0_6, %c0_7], %7 {strides = array<i32>} : memref<16x64xf32, #tpu.memory_space<vmem>>, vector<16x64xf32>,
    %c0_i32_8 = arith.constant 0 : i32
    %9 = arith.cmpi eq, %arg2, %c0_i32_8 : i32
    %10 = arith.extui %9 : i1 to i32
    %c0_i32_9 = arith.constant 0 : i32
    %11 = arith.cmpi ne, %10, %c0_i32_9 : i32
    scf.if %11 {
      %c0_10 = arith.constant 0 : index
      %c0_11 = arith.constant 0 : index
      %12 = vector.load %arg6[%c0_10, %c0_11] : memref<16x64xf32, #tpu.memory_space<vmem>>, vector<16x64xf32>
      %c0_12 = arith.constant 0 : index
      %c0_13 = arith.constant 0 : index
      %13 = vector.load %arg5[%c0_12, %c0_13] : memref<16x64xf32, #tpu.memory_space<vmem>>, vector<16x64xf32>
      tpu.vector_store %arg5[%c0_12, %c0_13], %12 {strides = array<i32>} : memref<16x64xf32, #tpu.memory_space<vmem>>, vector<16x64xf32>,
    } else {
    }
    return
  }
  func.func @transform_0(%arg0: i32, %arg1: i32, %arg2: i32) -> (i32, i32) {
    %c0_i32 = arith.constant 0 : i32
    return %arg0, %arg2 : i32, i32
  }
  func.func @transform_1(%arg0: i32, %arg1: i32, %arg2: i32) -> (i32, i32) {
    %c0_i32 = arith.constant 0 : i32
    return %arg2, %arg1 : i32, i32
  }
  func.func @transform_2(%arg0: i32, %arg1: i32, %arg2: i32) -> (i32, i32) {
    %c0_i32 = arith.constant 0 : i32
    return %arg0, %arg1 : i32, i32
  }
}

</mosaic_0001>

<llo_original>
// kernel: tpu_custom_call.1
$region0: #{tpu_custom_call.1}
  #allocation0 [shape = 'u32[]', space=smem, size = 0x4, offset = 0x4, fixed_abs, tag = 'smem constant byte address 0x4 - core index']
  #allocation1 [shape = 'u32[144,128]{1,0:T(1,128)}', space=vmem, size = 0x12000, scoped, tag = 'internal scratch']
  #allocation2 [shape = 'f32[16,64]{1,0:T(8,128)}', space=vmem, size = 0x2000, scoped, tag = 'scratch operand']
  %s0 = inlined_call_operand.hbm [shape: f32[16,32], index: 0, kind: input, shape index: {}]
  %s1 = inlined_call_operand.hbm [shape: f32[32,64], index: 1, kind: input, shape index: {}]
  %s2 = inlined_call_operand.hbm [shape: f32[16,64], index: 2, kind: output, shape index: {}]
  %s3 = sld [smem:[#allocation0]]
  $region34: #{tpu_custom_call.1} parent=0
    _
  %s5 = ssub.s32 1, %s3
  %s6 = scalar_select 0, %s5, %s3
  $region1: #{tpu_custom_call.1} parent=0
    #allocation3 [shape = 'u8[8192]{0}', space=vmem, size = 0x2000, scoped, tag = 'input window, operand 0, single buffered']
    #allocation4 [shape = 's32[1]{0}', space=sflag, size = 0x4, scoped, tag = 'scoped memory for tpu_custom_call.1']
    #allocation5 [shape = 's32[1]{0}', space=sflag, size = 0x4, scoped, tag = 'scoped memory for tpu_custom_call.1']
    #allocation6 [shape = 'u8[16384]{0}', space=vmem, size = 0x4000, scoped, tag = 'input window, operand 1, single buffered']
    #allocation7 [shape = 's32[1]{0}', space=sflag, size = 0x4, scoped, tag = 'scoped memory for tpu_custom_call.1']
    #allocation8 [shape = 'u8[8192]{0}', space=vmem, size = 0x2000, scoped, tag = 'output window, operand 0, single buffered']
    %7 = vsyncpa [#allocation4], 0
    %8 = vsyncpa [#allocation7], 0
    %9 = vsyncpa [#allocation5], 0
    // Predicated region
    $region2: #{tpu_custom_call.1} parent=1 // pred_check
      _
    $region3: #{tpu_custom_call.1} parent=1 // pred_check_branch
      %11 = sbr.rel (0) target = $region5
    $region4: #{tpu_custom_call.1} parent=1 // pred_region
      %s13 = ssub.s32 256, 256
      %14 = vsyncadd [#allocation4], %s13
      %s15 = sshll.u32 [#allocation3], 4
      %s16 = int_to_ptr.vmem [resolvable:$true] %s15
      %21 = dma.hbm_to_vmem [thread:$0]  %s0, 256, %s16, [#allocation4], 128, 128, 8
    $region5: #{tpu_custom_call.1} parent=1 // pred_fallthru
      _
    // Predicated region
    $region6: #{tpu_custom_call.1} parent=1 // pred_check
      _
    $region7: #{tpu_custom_call.1} parent=1 // pred_check_branch
      %23 = sbr.rel (0) target = $region9
    $region8: #{tpu_custom_call.1} parent=1 // pred_region
      %s25 = ssub.s32 512, 512
      %26 = vsyncadd [#allocation7], %s25
      %s27 = sshll.u32 [#allocation6], 4
      %s28 = int_to_ptr.vmem [resolvable:$true] %s27
      %33 = dma.hbm_to_vmem [thread:$0]  %s1, 512, %s28, [#allocation7], 128, 128, 8
    $region9: #{tpu_custom_call.1} parent=1 // pred_fallthru
      _
    // Predicated region
    $region10: #{tpu_custom_call.1} parent=1 // pred_check
      _
    $region11: #{tpu_custom_call.1} parent=1 // pred_check_branch
      %35 = sbr.rel (0) target = $region13
    $region12: #{tpu_custom_call.1} parent=1 // pred_region
      %36 = dma.done [#allocation4], 256
    $region13: #{tpu_custom_call.1} parent=1 // pred_fallthru
      _
    // Predicated region
    $region14: #{tpu_custom_call.1} parent=1 // pred_check
      _
    $region15: #{tpu_custom_call.1} parent=1 // pred_check_branch
      %38 = sbr.rel (0) target = $region17
    $region16: #{tpu_custom_call.1} parent=1 // pred_region
      %39 = dma.done [#allocation7], 512
    $region17: #{tpu_custom_call.1} parent=1 // pred_fallthru
      _
    %p40 = scmp.eq.s32.totalorder 0, 0
    // Predicated region
    $region18: #{tpu_custom_call.1} parent=1 // pred_check
      %p41 = pneg %p40
    $region19: #{tpu_custom_call.1} parent=1 // pred_check_branch
      %43 = sbr.rel (%p41) target = $region21
    $region20: #{tpu_custom_call.1} parent=1 // pred_region
      %vm44 = vcmask 523264
      %45 = vst.msk [vmem:[#allocation2] sm:$0xff] %vm44, 0.0
      %46 = vst.msk [vmem:[#allocation2 + $0x8] sm:$0xff] %vm44, 0.0
    $region21: #{tpu_custom_call.1} parent=1 // pred_fallthru
      _
    %v47 = vld [vmem:[#allocation2] sm:$0xff]
    %v48 = vld [vmem:[#allocation2 + $0x8] sm:$0xff]
    %v49 = vld [vmem:[#allocation3] sm:$0xff]
    %v50 = vld [vmem:[#allocation3 + $0x8] sm:$0xff]
    %v51 = vld [vmem:[#allocation6] sm:$0xff]
    %v52 = vld [vmem:[#allocation6 + $0x8] sm:$0xff]
    %v53 = vld [vmem:[#allocation6 + $0x10] sm:$0xff]
    %v54 = vld [vmem:[#allocation6 + $0x18] sm:$0xff]
    %vm55 = vcmask 261120
    %v57 = vsel %vm55, %v49, 0
    %v60 = vsel %vm55, %v50, 0
    %62 = vmatprep.subr.mxu0 0.0
    %63 = vmatpush1.msra.mxu0 %v51
    %64 = vmatprep.subr.mxu0 0.0
    %65 = vmatpush1.msra.mxu0 %v52
    %66 = vmatprep.subr.mxu0 0.0
    %67 = vmatpush1.msra.mxu0 %v53
    %68 = vmatprep.subr.mxu0 0.0
    %69 = vmatpush1.msra.mxu0 %v54
    %70 = vmatprep.subr.mxu0 0.0
    %71 = vmatpush1.msra.mxu0 0.0
    %72 = vmatprep.subr.mxu0 0.0
    %73 = vmatpush1.msra.mxu0 0.0
    %74 = vmatprep.subr.mxu0 0.0
    %75 = vmatpush1.msra.mxu0 0.0
    %76 = vmatprep.subr.mxu0 0.0
    %77 = vmatpush1.msra.mxu0 0.0
    %78 = vmatprep.subr.mxu0 0.0
    %79 = vmatpush1.msra.mxu0 0.0
    %80 = vmatprep.subr.mxu0 0.0
    %81 = vmatpush1.msra.mxu0 0.0
    %82 = vmatprep.subr.mxu0 0.0
    %83 = vmatpush1.msra.mxu0 0.0
    %84 = vmatprep.subr.mxu0 0.0
    %85 = vmatpush1.msra.mxu0 0.0
    %86 = vmatprep.subr.mxu0 0.0
    %87 = vmatpush1.msra.mxu0 0.0
    %88 = vmatprep.subr.mxu0 0.0
    %89 = vmatpush1.msra.mxu0 0.0
    %90 = vmatprep.subr.mxu0 0.0
    %91 = vmatpush1.msra.mxu0 0.0
    %92 = vmatprep.subr.mxu0 0.0
    %93 = vmatpush1.msra.mxu0 0.0
    %94 = vmatprep.subr.mxu0 0.0
    %95 = vmatpush1.msra.mxu0 0.0
    %96 = vmatprep.subr.mxu0 0.0
    %97 = vmatpush1.msra.mxu0 0.0
    %98 = vmatprep.subr.mxu0 0.0
    %99 = vmatpush1.msra.mxu0 0.0
    %100 = vmatprep.subr.mxu0 0.0
    %101 = vmatpush1.msra.mxu0 0.0
    %102 = vmatprep.subr.mxu0 0.0
    %103 = vmatpush1.msra.mxu0 0.0
    %104 = vmatprep.subr.mxu0 0.0
    %105 = vmatpush1.msra.mxu0 0.0
    %106 = vmatprep.subr.mxu0 0.0
    %107 = vmatpush1.msra.mxu0 0.0
    %108 = vmatprep.subr.mxu0 0.0
    %109 = vmatpush1.msra.mxu0 0.0
    %110 = vmatprep.subr.mxu0 0.0
    %111 = vmatpush1.msra.mxu0 0.0
    %112 = vmatprep.subr.mxu0 0.0
    %113 = vmatpush1.msra.mxu0 0.0
    %114 = vmatprep.subr.mxu0 0.0
    %115 = vmatpush1.msra.mxu0 0.0
    %116 = vmatprep.subr.mxu0 0.0
    %117 = vmatpush1.msra.mxu0 0.0
    %118 = vmatprep.subr.mxu0 0.0
    %119 = vmatpush1.msra.mxu0 0.0
    %120 = vmatprep.subr.mxu0 0.0
    %121 = vmatpush1.msra.mxu0 0.0
    %122 = vmatprep.subr.mxu0 0.0
    %123 = vmatpush1.msra.mxu0 0.0
    %124 = vmatprep.subr.mxu0 0.0
    %125 = vmatpush1.msra.mxu0 0.0
    %126 = vmatprep.mubr.f32.mxu0 0.0
    %127 = vmatmul.mubr.f32.gmra.mrb[0].mxu0 %v57
    %v128 = vpop.f32.mrb[0].mxu0
    %v129 = vadd.f32 0.0, %v128
    %v130 = vpop.f32.mrb[0].mxu0
    %131 = vmatprep.mubr.f32.mxu0 0.0
    %132 = vmatmul.mubr.f32.gmra.mrb[0].mxu0 %v60
    %v133 = vpop.f32.mrb[0].mxu0
    %v134 = vadd.f32 0.0, %v133
    %v135 = vpop.f32.mrb[0].mxu0
    %136 = vdwg.mxu0
    %v137 = vadd.f32 %v47, %v129
    %v138 = vadd.f32 %v48, %v134
    %vm139 = vcmask 523264
    %140 = vst.msk [vmem:[#allocation2] sm:$0xff] %vm139, %v137
    %141 = vst.msk [vmem:[#allocation2 + $0x8] sm:$0xff] %vm139, %v138
    // Predicated region
    $region22: #{tpu_custom_call.1} parent=1 // pred_check
      %p142 = pneg %p40
    $region23: #{tpu_custom_call.1} parent=1 // pred_check_branch
      %144 = sbr.rel (%p142) target = $region25
    $region24: #{tpu_custom_call.1} parent=1 // pred_region
      %v145 = vld [vmem:[#allocation2] sm:$0xff]
      %v146 = vld [vmem:[#allocation2 + $0x8] sm:$0xff]
      %147 = vst.msk [vmem:[#allocation8] sm:$0xff] %vm139, %v145
      %148 = vst.msk [vmem:[#allocation8 + $0x8] sm:$0xff] %vm139, %v146
    $region25: #{tpu_custom_call.1} parent=1 // pred_fallthru
      _
    // Predicated region
    $region26: #{tpu_custom_call.1} parent=1 // pred_check
      _
    $region27: #{tpu_custom_call.1} parent=1 // pred_check_branch
      %150 = sbr.rel (0) target = $region29
    $region28: #{tpu_custom_call.1} parent=1 // pred_region
      %s152 = ssub.s32 256, 256
      %153 = vsyncadd [#allocation5], %s152
      %s154 = sshll.u32 [#allocation8], 4
      %s155 = int_to_ptr.vmem [resolvable:$true] %s154
      %160 = dma.vmem_to_hbm [thread:$0]  %s155, 256, %s2, [#allocation5], 128, 128, 8
    $region29: #{tpu_custom_call.1} parent=1 // pred_fallthru
      _
    // Predicated region
    $region30: #{tpu_custom_call.1} parent=1 // pred_check
      _
    $region31: #{tpu_custom_call.1} parent=1 // pred_check_branch
      %162 = sbr.rel (0) target = $region33
    $region32: #{tpu_custom_call.1} parent=1 // pred_region
      %163 = dma.done [#allocation5], 256
    $region33: #{tpu_custom_call.1} parent=1 // pred_fallthru
      _
    %164 = vsyncpa [#allocation4], 1
    %165 = vsyncpa [#allocation7], 1
    %166 = vsyncpa [#allocation5], 1

</llo_original>
